<compile_context>
chip_gen: v6e
topology: v6e:2x2x1
jax: 0.10.0
libtpu: 0.0.40
codegen_flags: <defaults>
</compile_context>

<pallas_src>
import numpy as np
import jax
import jax.numpy as jnp
from jax import lax
from jax.experimental import pallas as pl
from jax.experimental.pallas import tpu as pltpu


def _make_stencil_kernel(taps, K, H, W, Ho, Wo):
    """taps: K x K nested list of Python floats (1/resol already folded in)."""
    nz = [(ki, kj, float(taps[ki][kj]))
          for ki in range(K) for kj in range(K)
          if float(taps[ki][kj]) != 0.0]
    # Axis-aligned taps (ki == 0 or kj == 0) first, so their rolled blocks are
    # reused as bases for the off-axis taps (greedy roll de-duplication).
    order = sorted(nz, key=lambda t: (t[0] != 0 and t[1] != 0, t[0], t[1]))

    def kernel(x_ref, o_ref):
        xb = x_ref[...]                       # (TB, H, W): single whole-block load
        cache = {(0, 0): xb}

        def rolled(ki, kj):
            key = (ki, kj)
            if key in cache:
                return cache[key]
            if ki == 0:                       # pure column shift: lane roll (XLU)
                r = pltpu.roll(xb, shift=W - kj, axis=2)
            elif kj == 0:                     # pure row shift: sublane roll (XLU)
                r = pltpu.roll(xb, shift=H - ki, axis=1)
            elif (ki, 0) in cache:            # reuse row-rolled base
                r = pltpu.roll(cache[(ki, 0)], shift=W - kj, axis=2)
            elif (0, kj) in cache:            # reuse col-rolled base
                r = pltpu.roll(cache[(0, kj)], shift=H - ki, axis=1)
            else:
                r = pltpu.roll(rolled(ki, 0), shift=W - kj, axis=2)
            cache[key] = r
            return r

        acc = None
        for ki, kj, tap in order:
            term = tap * rolled(ki, kj)
            acc = term if acc is None else acc + term
        if acc is None:                       # degenerate all-zero filter
            acc = jnp.zeros((xb.shape[0], H, W), jnp.float32)

        # Roll wraparound only pollutes rows i >= Ho and columns j >= Wo, which
        # are never stored: the kernel output IS the final valid-conv result.
        o_ref[...] = acc[:, :Ho, :Wo]

    return kernel


def conv2d_derivative(x, der_filter, resol):
    """Pallas equivalent of Conv2dDerivative.forward.

    x:          (N, 1, H, W) float32
    der_filter: (1, 1, K, K) fixed, non-trainable derivative stencil
    resol:      python float (e.g. c*dx**2)
    returns     (N, 1, H-K+1, W-K+1) float32
    """
    N, C, H, W = x.shape
    assert C == 1, "Conv2dDerivative uses a single input channel"

    w = np.asarray(der_filter, dtype=np.float32)
    K = int(w.shape[-1])
    w2d = w.reshape(w.shape[-2], w.shape[-1])
    assert w2d.shape == (K, K)
    assert H >= K and W >= K
    Ho, Wo = H - K + 1, W - K + 1

    # Fold the 1/resol scale into the taps (host side, Python floats).
    taps = (w2d / np.float32(resol)).tolist()

    # ---- batch-tile sizing against a VMEM budget ---------------------------
    # Live f32 planes per batch element per step ~= xb + acc + temp + store
    # + cached axis-rolled intermediates + double-buffered in/out.
    nzk_i = len({ki for ki in range(K) for kj in range(K)
                 if float(taps[ki][kj]) != 0.0 and ki != 0})
    nzk_j = len({kj for ki in range(K) for kj in range(K)
                 if float(taps[ki][kj]) != 0.0 and kj != 0})
    live_factor = 6 + nzk_i + nzk_j

    try:
        phys_vmem = int(pltpu.get_tpu_info().vmem_capacity_bytes)
    except Exception:
        phys_vmem = 64 << 20
    small_vmem = phys_vmem <= (64 << 20)          # v7x-class: 64 MiB per TC
    budget = (24 << 20) if small_vmem else (40 << 20)
    vmem_cap = (48 << 20) if small_vmem else (64 << 20)

    per_batch = live_factor * H * W * 4
    tb_cap = max(1, budget // per_batch)
    # Keep >= 2 grid steps when N allows (megacore / pipelining); ragged last
    # block is masked by Pallas, so TB need not divide N.
    TB = int(min(tb_cap, -(-N // 2))) if N > 1 else 1
    grid = ((N + TB - 1) // TB,)

    est = per_batch * TB
    vmem_limit = None
    if est > (12 << 20):
        vmem_limit = int(min(max(est + (8 << 20), 32 << 20), vmem_cap))

    # TODO(synk): row-tile very large planes (grid axis over Ho with K-1 halo
    # rows) for v7x (64 MiB VMEM, 2 TCs) and for N == 1; whole-plane blocks here.
    # TODO(synk): when W < 128 and N is large, pack batch planes side-by-side
    # along the lane axis in the wrapper to raise VPU/XLU/store utilization.

    kernel = _make_stencil_kernel(taps, K, H, W, Ho, Wo)
    x_sq = x.reshape(N, H, W).astype(jnp.float32)

    out = pl.pallas_call(
        kernel,
        out_shape=jax.ShapeDtypeStruct((N, Ho, Wo), jnp.float32),
        grid_spec=pltpu.PrefetchScalarGridSpec(
            num_scalar_prefetch=0,
            grid=grid,
            in_specs=[pl.BlockSpec((TB, H, W), lambda n: (n, 0, 0))],
            out_specs=pl.BlockSpec((TB, Ho, Wo), lambda n: (n, 0, 0)),
        ),
        compiler_params=pltpu.CompilerParams(
            dimension_semantics=("parallel",),
            vmem_limit_bytes=vmem_limit),
    )(x_sq)

    # Kernel already produced the exact valid-conv window; only add the
    # singleton channel dim back (metadata-only, no extra HBM pass).
    return out.reshape(N, 1, Ho, Wo)


if __name__ == "__main__":
    # 5x5 Laplace derivative stencil (as used for the 2D Burgers baselines)
    # with resolution scale resol = dx**2.
    lapl_filter = jnp.array(
        [[[[0.0,      0.0,     -1.0 / 12, 0.0,      0.0],
           [0.0,      0.0,      4.0 / 3,  0.0,      0.0],
           [-1.0/12,  4.0/3,   -5.0,      4.0/3,   -1.0/12],
           [0.0,      0.0,      4.0 / 3,  0.0,      0.0],
           [0.0,      0.0,     -1.0 / 12, 0.0,      0.0]]]],
        dtype=jnp.float32)
    dx = 1.0 / 16.0
    resol = float(dx * dx)

    key = jax.random.PRNGKey(0)
    x = jax.random.normal(key, (2, 1, 16, 16), dtype=jnp.float32)

    y = conv2d_derivative(x, lapl_filter, resol)
    y = jax.block_until_ready(y)

    # Reference: XLA conv (same semantics as nn.Conv2d, valid padding) / resol.
    y_ref = lax.conv_general_dilated(
        x, lapl_filter, window_strides=(1, 1), padding="VALID",
        dimension_numbers=("NCHW", "OIHW", "NCHW")) / resol

    assert y.shape == (2, 1, 12, 12)
    assert jnp.allclose(y, y_ref, rtol=1e-5, atol=1e-3)

    print("KERNEL_OK")
</pallas_src>

<mosaic_0001>
module attributes {stable_mosaic.version = 11 : i64} {
  func.func @kernel(%arg0: i32, %arg1: memref<1x16x16xf32, #tpu.memory_space<vmem>>, %arg2: memref<1x12x12xf32, #tpu.memory_space<vmem>>) attributes {dimension_semantics = [#tpu.dimension_semantics<parallel>], iteration_bounds = array<i64: 2>, scalar_prefetch = 0 : i64, scratch_operands = 0 : i64, tpu.core_type = #tpu.core_type<tc>, window_params = [{transform_indices = @transform_0, window_bounds = array<i64: 1, 16, 16>}, {transform_indices = @transform_1, window_bounds = array<i64: 1, 12, 12>}]} {
    %c0 = arith.constant 0 : index
    %c0_0 = arith.constant 0 : index
    %c0_1 = arith.constant 0 : index
    %0 = vector.load %arg1[%c0, %c0_0, %c0_1] : memref<1x16x16xf32, #tpu.memory_space<vmem>>, vector<1x16x16xf32>
    %c14_i32 = arith.constant 14 : i32
    %1 = tpu.dynamic_rotate %0 by %c14_i32 dim 2 : vector<1x16x16xf32>, i32 -> vector<1x16x16xf32>
    %cst = arith.constant -21.333334 : f32
    %2 = vector.broadcast %cst : f32 to vector<1x16x16xf32>
    %3 = arith.mulf %2, %1 : vector<1x16x16xf32>
    %c14_i32_2 = arith.constant 14 : i32
    %4 = tpu.dynamic_rotate %0 by %c14_i32_2 dim 1 : vector<1x16x16xf32>, i32 -> vector<1x16x16xf32>
    %cst_3 = arith.constant -21.333334 : f32
    %5 = vector.broadcast %cst_3 : f32 to vector<1x16x16xf32>
    %6 = arith.mulf %5, %4 : vector<1x16x16xf32>
    %7 = arith.addf %3, %6 : vector<1x16x16xf32>
    %c15_i32 = arith.constant 15 : i32
    %8 = tpu.dynamic_rotate %1 by %c15_i32 dim 1 : vector<1x16x16xf32>, i32 -> vector<1x16x16xf32>
    %cst_4 = arith.constant 341.333344 : f32
    %9 = vector.broadcast %cst_4 : f32 to vector<1x16x16xf32>
    %10 = arith.mulf %9, %8 : vector<1x16x16xf32>
    %11 = arith.addf %7, %10 : vector<1x16x16xf32>
    %c15_i32_5 = arith.constant 15 : i32
    %12 = tpu.dynamic_rotate %4 by %c15_i32_5 dim 2 : vector<1x16x16xf32>, i32 -> vector<1x16x16xf32>
    %cst_6 = arith.constant 341.333344 : f32
    %13 = vector.broadcast %cst_6 : f32 to vector<1x16x16xf32>
    %14 = arith.mulf %13, %12 : vector<1x16x16xf32>
    %15 = arith.addf %11, %14 : vector<1x16x16xf32>
    %c14_i32_7 = arith.constant 14 : i32
    %16 = tpu.dynamic_rotate %4 by %c14_i32_7 dim 2 : vector<1x16x16xf32>, i32 -> vector<1x16x16xf32>
    %cst_8 = arith.constant -1.280000e+03 : f32
    %17 = vector.broadcast %cst_8 : f32 to vector<1x16x16xf32>
    %18 = arith.mulf %17, %16 : vector<1x16x16xf32>
    %19 = arith.addf %15, %18 : vector<1x16x16xf32>
    %c13_i32 = arith.constant 13 : i32
    %20 = tpu.dynamic_rotate %4 by %c13_i32 dim 2 : vector<1x16x16xf32>, i32 -> vector<1x16x16xf32>
    %cst_9 = arith.constant 341.333344 : f32
    %21 = vector.broadcast %cst_9 : f32 to vector<1x16x16xf32>
    %22 = arith.mulf %21, %20 : vector<1x16x16xf32>
    %23 = arith.addf %19, %22 : vector<1x16x16xf32>
    %c12_i32 = arith.constant 12 : i32
    %24 = tpu.dynamic_rotate %4 by %c12_i32 dim 2 : vector<1x16x16xf32>, i32 -> vector<1x16x16xf32>
    %cst_10 = arith.constant -21.333334 : f32
    %25 = vector.broadcast %cst_10 : f32 to vector<1x16x16xf32>
    %26 = arith.mulf %25, %24 : vector<1x16x16xf32>
    %27 = arith.addf %23, %26 : vector<1x16x16xf32>
    %c13_i32_11 = arith.constant 13 : i32
    %28 = tpu.dynamic_rotate %1 by %c13_i32_11 dim 1 : vector<1x16x16xf32>, i32 -> vector<1x16x16xf32>
    %cst_12 = arith.constant 341.333344 : f32
    %29 = vector.broadcast %cst_12 : f32 to vector<1x16x16xf32>
    %30 = arith.mulf %29, %28 : vector<1x16x16xf32>
    %31 = arith.addf %27, %30 : vector<1x16x16xf32>
    %c12_i32_13 = arith.constant 12 : i32
    %32 = tpu.dynamic_rotate %1 by %c12_i32_13 dim 1 : vector<1x16x16xf32>, i32 -> vector<1x16x16xf32>
    %cst_14 = arith.constant -21.333334 : f32
    %33 = vector.broadcast %cst_14 : f32 to vector<1x16x16xf32>
    %34 = arith.mulf %33, %32 : vector<1x16x16xf32>
    %35 = arith.addf %31, %34 : vector<1x16x16xf32>
    %36 = vector.extract_strided_slice %35 {offsets = [0, 0, 0], sizes = [1, 12, 12], strides = [1, 1, 1]} : vector<1x16x16xf32> to vector<1x12x12xf32>
    %c0_15 = arith.constant 0 : index
    %c0_16 = arith.constant 0 : index
    %c0_17 = arith.constant 0 : index
    %37 = vector.load %arg2[%c0_15, %c0_16, %c0_17] : memref<1x12x12xf32, #tpu.memory_space<vmem>>, vector<1x12x12xf32>
    tpu.vector_store %arg2[%c0_15, %c0_16, %c0_17], %36 {strides = array<i32>} : memref<1x12x12xf32, #tpu.memory_space<vmem>>, vector<1x12x12xf32>,
    return
  }
  func.func @transform_0(%arg0: i32) -> (i32, i32, i32) {
    %c0_i32 = arith.constant 0 : i32
    %c0_i32_0 = arith.constant 0 : i32
    %c0_i32_1 = arith.constant 0 : i32
    return %arg0, %c0_i32, %c0_i32_0 : i32, i32, i32
  }
  func.func @transform_1(%arg0: i32) -> (i32, i32, i32) {
    %c0_i32 = arith.constant 0 : i32
    %c0_i32_0 = arith.constant 0 : i32
    %c0_i32_1 = arith.constant 0 : i32
    return %arg0, %c0_i32, %c0_i32_0 : i32, i32, i32
  }
}

</mosaic_0001>

<llo_original>
// kernel: tpu_custom_call.1
$region0: #{tpu_custom_call.1}
  #allocation0 [shape = 'u32[]', space=smem, size = 0x4, offset = 0x4, fixed_abs, tag = 'smem constant byte address 0x4 - core index']
  #allocation1 [shape = 'u32[144,128]{1,0:T(1,128)}', space=vmem, size = 0x12000, scoped, tag = 'internal scratch']
  %s0 = inlined_call_operand.hbm [shape: f32[2,16,16], index: 0, kind: input, shape index: {}]
  %s1 = inlined_call_operand.vmem [shape: f32[2,12,12], index: 1, kind: output, shape index: {}]
  %s2 = sld [smem:[#allocation0]]
  $region41: #{tpu_custom_call.1} parent=0
    _
  %s4 = ssub.s32 1, %s2
  %s5 = scalar_select 0, %s4, %s2
  $region1: #{tpu_custom_call.1} parent=0
    #allocation2 [shape = 'u8[16384]{0}', space=vmem, size = 0x4000, scoped, tag = 'input window, operand 0']
    #allocation3 [shape = 's32[2]{0}', space=sflag, size = 0x8, scoped, tag = 'scoped memory for tpu_custom_call.1']
    %6 = vsyncpa [#allocation3], 0
    %s7 = scalar_lea.sflag [#allocation3], 1
    %8 = vsyncpa %s7, 0
    loop: start=0, step=1, limit=4
    $region2: #{tpu_custom_call.1} parent=1 // loop_pre_header
      _
    $region3: #{tpu_custom_call.1} parent=1 // loop_header
      %s10 = sphi 0, %s14
      %p11 = scmp.ge.s32.totalorder %s10, 4
      %s20 = sphi 0, %s22
      %s23 = sphi 0, %s20
      %s24 = sphi 0, %s23
      %s40 = sphi 0, %s24
      %s46 = sphi 0, %s48
      %s49 = sphi 0, %s46
      %s50 = sphi 0, %s49
      %s66 = sphi 0, %s50
    $region4: #{tpu_custom_call.1} parent=1 // loop_header_branch
      %13 = sbr.rel (%p11) target = $region8
    $region5: #{tpu_custom_call.1} parent=1 // loop_body
      %s15 = ssub.s32 %s10, 1
      %s16 = ssub.s32 %s10, 2
      %s17 = sadd.s32 %s10, 1
      %s18 = ssub.s32 %s10, %s17
      %p19 = scmp.eq.s32.totalorder %s18, 0
      %s21 = sadd.s32 %s20, 1
      %s22 = scalar_select %p19, %s20, %s21
      %p25 = pneg %p19
      %p26 = scmp.eq.s32.totalorder %s10, 1
      %p27 = por %p25, %p26
      %p28 = scmp.ne.s32.totalorder %s20, %s23
      %p29 = scmp.eq.s32.totalorder %s10, 0
      %p30 = por %p28, %p29
      %p31 = scmp.ne.s32.totalorder %s20, %s23
      %p32 = scmp.eq.s32.totalorder %s15, 1
      %p33 = por %p31, %p32
      %p34 = scmp.ne.s32.totalorder %s23, %s24
      %p35 = scmp.eq.s32.totalorder %s15, 0
      %p36 = por %p34, %p35
      %p37 = scmp.ne.s32.totalorder %s23, %s24
      %p38 = scmp.eq.s32.totalorder %s16, 1
      %p39 = por %p37, %p38
      %p41 = scmp.ne.s32.totalorder %s24, %s40
      %p42 = scmp.eq.s32.totalorder %s16, 0
      %p43 = por %p41, %p42
      %s44 = ssub.s32 %s10, %s17
      %p45 = scmp.eq.s32.totalorder %s44, 0
      %s47 = sadd.s32 %s46, 1
      %s48 = scalar_select %p45, %s46, %s47
      %p51 = pneg %p45
      %p52 = scmp.eq.s32.totalorder %s10, 1
      %p53 = por %p51, %p52
      %p54 = scmp.ne.s32.totalorder %s46, %s49
      %p55 = scmp.eq.s32.totalorder %s10, 0
      %p56 = por %p54, %p55
      %p57 = scmp.ne.s32.totalorder %s46, %s49
      %p58 = scmp.eq.s32.totalorder %s15, 1
      %p59 = por %p57, %p58
      %p60 = scmp.ne.s32.totalorder %s49, %s50
      %p61 = scmp.eq.s32.totalorder %s15, 0
      %p62 = por %p60, %p61
      %p63 = scmp.ne.s32.totalorder %s49, %s50
      %p64 = scmp.eq.s32.totalorder %s16, 1
      %p65 = por %p63, %p64
      %p67 = scmp.ne.s32.totalorder %s50, %s66
      %p68 = scmp.eq.s32.totalorder %s16, 0
      %p69 = por %p67, %p68
      %p70 = scmp.le.s32.totalorder 1, %s10
      %p71 = scmp.lt.s32.totalorder %s10, 3
      %p72 = pnand %p70, %p71
      %p73 = pneg %p72
      // Predicated region
      $region9: #{tpu_custom_call.1} parent=5 // pred_check
        _
      $region10: #{tpu_custom_call.1} parent=5 // pred_check_branch
        %75 = sbr.rel (%p72) target = $region12
      $region11: #{tpu_custom_call.1} parent=5 // pred_region
        %s76 = ssub.s32 %s10, 1
      $region12: #{tpu_custom_call.1} parent=5 // pred_fallthru
        _
      %p77 = scmp.lt.s32.totalorder %s10, 2
      // Predicated region
      $region13: #{tpu_custom_call.1} parent=5 // pred_check
        %p78 = pneg %p77
      $region14: #{tpu_custom_call.1} parent=5 // pred_check_branch
        %80 = sbr.rel (%p78) target = $region16
      $region15: #{tpu_custom_call.1} parent=5 // pred_region
        // Predicated region
        $region17: #{tpu_custom_call.1} parent=15 // pred_check
          %p81 = pneg %p30
        $region18: #{tpu_custom_call.1} parent=15 // pred_check_branch
          %83 = sbr.rel (%p81) target = $region20
        $region19: #{tpu_custom_call.1} parent=15 // pred_region
          %s84 = sand.u32 %s20, 1
          %s85 = scalar_lea.sflag [#allocation3], %s84
          %s86 = sand.u32 %s20, 1
          %s87 = smul.addr %s86, 16
          %s88 = scalar_lea.vmem [#allocation2], %s87
          %s90 = ssub.s32 256, 256
          %91 = vsyncadd %s85, %s90
          %s92 = smul.addr %s10, 2
          %s93 = smul.addr %s92, 128
          %s94 = scalar_lea.hbm %s0, %s93
          %s95 = sshll.u32 %s88, 4
          %s96 = int_to_ptr.vmem [resolvable:$true] %s95
          %101 = dma.hbm_to_vmem [thread:$0]  %s94, 256, %s96, %s85, 128, 128, 8
        $region20: #{tpu_custom_call.1} parent=15 // pred_fallthru
          _
      $region16: #{tpu_custom_call.1} parent=5 // pred_fallthru
        _
      %p102 = scmp.le.s32.totalorder 1, %s10
      %p103 = scmp.lt.s32.totalorder %s10, 3
      %p104 = pnand %p102, %p103
      %p105 = pneg %p104
      // Predicated region
      $region21: #{tpu_custom_call.1} parent=5 // pred_check
        _
      $region22: #{tpu_custom_call.1} parent=5 // pred_check_branch
        %107 = sbr.rel (%p104) target = $region24
      $region23: #{tpu_custom_call.1} parent=5 // pred_region
        %s108 = ssub.s32 %s10, 1
        %s109 = sand.u32 %s23, 1
        %s110 = scalar_lea.sflag [#allocation3], %s109
        %s111 = sand.u32 %s23, 1
        %s112 = smul.addr %s111, 16
        %s113 = scalar_lea.vmem [#allocation2], %s112
        // Predicated region
        $region25: #{tpu_custom_call.1} parent=23 // pred_check
          %p114 = pneg %p36
        $region26: #{tpu_custom_call.1} parent=23 // pred_check_branch
          %116 = sbr.rel (%p114) target = $region28
        $region27: #{tpu_custom_call.1} parent=23 // pred_region
          %117 = dma.done %s110, 256
        $region28: #{tpu_custom_call.1} parent=23 // pred_fallthru
          _
        %s118 = sand.u32 %s23, 1
        %s119 = scalar_lea.sflag [#allocation3], %s118
        %s120 = sand.u32 %s23, 1
        %s121 = smul.addr %s120, 16
        %s122 = scalar_lea.vmem [#allocation2], %s121
        %p123 = pneg %p36
        %p124 = pneg %p33
        %p125 = pneg %p62
        %p126 = pneg %p59
        %p127 = scmp.lt.s32.totalorder %s15, 1
        %s128 = scalar_select %p127, %s15, 1
        %s129 = smul.addr %s128, 2
        %s130 = smul.addr %s129, 8
        %s131 = scalar_lea.vmem %s1, %s130
        %p132 = scmp.lt.s32.totalorder %s15, 1
        %s133 = scalar_select %p132, %s15, 1
        %s134 = smul.addr %s133, 2
        %s135 = smul.addr %s134, 8
        %s136 = scalar_lea.vmem %s1, %s135
        %v137 = vld [vmem:[%s113] sm:$0xff]
        %v138 = vld [vmem:[%s113 + $0x8] sm:$0xff]
        %vm139 = vcmask 1047680
        %140 = vrot.lane.b32.xlu0 %v137, 16
        %v141 = vpop.permute.xlu0 %140
        %v142 = vsel %vm139, %v141, %v137
        %143 = vrot.lane.b32.xlu0 %v138, 16
        %v144 = vpop.permute.xlu0 %143
        %v145 = vsel %vm139, %v144, %v138
        %146 = vrot.lane.b32.xlu0 %v142, 16
        %v147 = vpop.permute.xlu0 %146
        %148 = vrot.lane.b32.xlu0 %v145, 16
        %v149 = vpop.permute.xlu0 %148
        %v150 = vsel %vm139, %v147, %v137
        %v151 = vsel %vm139, %v149, %v138
        %v152 = vmul.f32 %v150, -21.333334
        %v153 = vmul.f32 %v151, -21.333334
        %v154 = vrot.slane %v137, 2
        %v155 = vrot.slane %v138, 2
        %v156 = vlaneseq
        %v157 = vshrl.u32 %v156, 7
        %vm158 = vcmp.lt.s32.totalorder %v157, 6
        %v159 = vsel %vm158, %v154, %v155
        %v160 = vsel %vm158, %v155, %v154
        %v161 = vmul.f32 %v159, -21.333334
        %v162 = vmul.f32 %v160, -21.333334
        %165 = vrot.lane.b32.xlu0 %v161, 2
        %v166 = vpop.permute.xlu0 %165
        %167 = vrot.lane.b32.xlu0 %v162, 2
        %v168 = vpop.permute.xlu0 %167
        %v171 = vadd.f32 %v152, %v166
        %v172 = vadd.f32 %v153, %v168
        %175 = vrot.lane.b32.xlu0 %v150, 126
        %v176 = vpop.permute.xlu0 %175
        %177 = vrot.lane.b32.xlu0 %v151, 126
        %v178 = vpop.permute.xlu0 %177
        %v181 = vrot.slane %v176, 1
        %v182 = vrot.slane %v178, 1
        %vm183 = vcmp.lt.s32.totalorder %v157, 7
        %v184 = vsel %vm183, %v181, %v182
        %v185 = vsel %vm183, %v182, %v181
        %v186 = vmul.f32 %v184, 341.33334
        %v187 = vmul.f32 %v185, 341.33334
        %190 = vrot.lane.b32.xlu0 %v186, 2
        %v191 = vpop.permute.xlu0 %190
        %192 = vrot.lane.b32.xlu0 %v187, 2
        %v193 = vpop.permute.xlu0 %192
        %v196 = vadd.f32 %v171, %v191
        %v197 = vadd.f32 %v172, %v193
        %198 = vrot.lane.b32.xlu0 %v159, 16
        %v199 = vpop.permute.xlu0 %198
        %v200 = vsel %vm139, %v199, %v159
        %201 = vrot.lane.b32.xlu0 %v160, 16
        %v202 = vpop.permute.xlu0 %201
        %v203 = vsel %vm139, %v202, %v160
        %204 = vrot.lane.b32.xlu0 %v200, 16
        %v205 = vpop.permute.xlu0 %204
        %206 = vrot.lane.b32.xlu0 %v203, 16
        %v207 = vpop.permute.xlu0 %206
        %v208 = vsel %vm139, %v205, %v159
        %v209 = vsel %vm139, %v207, %v160
        %v210 = vmul.f32 %v208, 341.33334
        %v211 = vmul.f32 %v209, 341.33334
        %214 = vrot.lane.b32.xlu0 %v210, 1
        %v215 = vpop.permute.xlu0 %214
        %216 = vrot.lane.b32.xlu0 %v211, 1
        %v217 = vpop.permute.xlu0 %216
        %v220 = vadd.f32 %v196, %v215
        %v221 = vadd.f32 %v197, %v217
        %v222 = vmul.f32 %v208, -1280.0
        %v223 = vmul.f32 %v209, -1280.0
        %v224 = vadd.f32 %v220, %v222
        %v225 = vadd.f32 %v221, %v223
        %226 = vrot.lane.b32.xlu0 %v210, 127
        %v227 = vpop.permute.xlu0 %226
        %228 = vrot.lane.b32.xlu0 %v211, 127
        %v229 = vpop.permute.xlu0 %228
        %v232 = vadd.f32 %v224, %v227
        %v233 = vadd.f32 %v225, %v229
        %v234 = vmul.f32 %v208, -21.333334
        %v235 = vmul.f32 %v209, -21.333334
        %238 = vrot.lane.b32.xlu0 %v234, 126
        %v239 = vpop.permute.xlu0 %238
        %240 = vrot.lane.b32.xlu0 %v235, 126
        %v241 = vpop.permute.xlu0 %240
        %v244 = vadd.f32 %v232, %v239
        %v245 = vadd.f32 %v233, %v241
        %v246 = vrot.slane %v176, 3
        %v247 = vrot.slane %v178, 3
        %vm248 = vcmp.lt.s32.totalorder %v157, 5
        %v249 = vsel %vm248, %v246, %v247
        %v250 = vsel %vm248, %v247, %v246
        %v251 = vmul.f32 %v249, 341.33334
        %v252 = vmul.f32 %v250, 341.33334
        %255 = vrot.lane.b32.xlu0 %v251, 2
        %v256 = vpop.permute.xlu0 %255
        %257 = vrot.lane.b32.xlu0 %v252, 2
        %v258 = vpop.permute.xlu0 %257
        %v261 = vadd.f32 %v244, %v256
        %v262 = vadd.f32 %v245, %v258
        %v263 = vrot.slane %v176, 4
        %v264 = vrot.slane %v178, 4
        %vm265 = vcmp.lt.s32.totalorder %v157, 4
        %v266 = vsel %vm265, %v263, %v264
        %v267 = vsel %vm265, %v264, %v263
        %v268 = vmul.f32 %v266, -21.333334
        %v269 = vmul.f32 %v267, -21.333334
        %272 = vrot.lane.b32.xlu0 %v268, 2
        %v273 = vpop.permute.xlu0 %272
        %274 = vrot.lane.b32.xlu0 %v269, 2
        %v275 = vpop.permute.xlu0 %274
        %v278 = vadd.f32 %v261, %v273
        %v279 = vadd.f32 %v262, %v275
        %282 = vrot.lane.b32.xlu0 %v278, 126
        %v283 = vpop.permute.xlu0 %282
        %284 = vrot.lane.b32.xlu0 %v279, 126
        %v285 = vpop.permute.xlu0 %284
        %vm288 = vcmask 97280
        %289 = vst.msk [vmem:[%s136] sm:$0xff] %vm288, %v283
        %vm290 = vcmask 93184
        %291 = vst.msk [vmem:[%s136 + $0x8] sm:$0xf] %vm290, %v285
        %p292 = scmp.lt.s32.totalorder %s15, 1
        %s293 = scalar_select %p292, %s15, 1
        %s294 = smul.addr %s293, 2
        %s295 = smul.addr %s294, 8
        %s296 = scalar_lea.vmem %s1, %s295
        // Predicated region
        $region29: #{tpu_custom_call.1} parent=23 // pred_check
          %p297 = pneg %p59
        $region30: #{tpu_custom_call.1} parent=23 // pred_check_branch
          %299 = sbr.rel (%p297) target = $region32
        $region31: #{tpu_custom_call.1} parent=23 // pred_region
          _
        $region32: #{tpu_custom_call.1} parent=23 // pred_fallthru
          _
      $region24: #{tpu_custom_call.1} parent=5 // pred_fallthru
        _
      %p300 = scmp.le.s32.totalorder 2, %s10
      // Predicated region
      $region33: #{tpu_custom_call.1} parent=5 // pred_check
        %p301 = pneg %p300
      $region34: #{tpu_custom_call.1} parent=5 // pred_check_branch
        %303 = sbr.rel (%p301) target = $region36
      $region35: #{tpu_custom_call.1} parent=5 // pred_region
        %s304 = ssub.s32 %s10, 2
        // Predicated region
        $region37: #{tpu_custom_call.1} parent=35 // pred_check
          %p305 = pneg %p65
        $region38: #{tpu_custom_call.1} parent=35 // pred_check_branch
          %307 = sbr.rel (%p305) target = $region40
        $region39: #{tpu_custom_call.1} parent=35 // pred_region
          %p308 = scmp.lt.s32.totalorder %s16, 1
          %s309 = scalar_select %p308, %s16, 1
          %s310 = smul.addr %s309, 2
          %s311 = smul.addr %s310, 8
          %s312 = scalar_lea.vmem %s1, %s311
        $region40: #{tpu_custom_call.1} parent=35 // pred_fallthru
          _
      $region36: #{tpu_custom_call.1} parent=5 // pred_fallthru
        _
    $region6: #{tpu_custom_call.1} parent=1 // loop_footer
      %s14 = sadd.s32 1, %s10
    $region7: #{tpu_custom_call.1} parent=1 // loop_footer_branch
      %9 = sbr.rel target = $region3
    $region8: #{tpu_custom_call.1} parent=1 // loop_exit
      _
    %313 = vsyncpa [#allocation3], 1
    %s314 = scalar_lea.sflag [#allocation3], 1
    %315 = vsyncpa %s314, 1

</llo_original>
